<compile_context>
chip_gen: v5e
topology: v5e:2x2
jax: 0.10.0
libtpu: 0.0.40
codegen_flags: <defaults>
</compile_context>

<pallas_src>
import jax
import jax.numpy as jnp
from jax.experimental import pallas as pl
from jax.experimental.pallas import tpu as pltpu


def _ssm_kernel(x_ref, u_ref, wA_ref, wB_ref, o_ref):
    # x_ref:  (TILE_B, state_order*state_dim)   activation tile
    # u_ref:  (TILE_B, action_order*action_dim) activation tile
    # wA_ref: (state_order*state_dim, state_dim)  folded weight (residual incl.)
    # wB_ref: (action_order*action_dim, state_dim)
    # o_ref:  (TILE_B, state_dim)
    acc = jnp.dot(x_ref[...], wA_ref[...], preferred_element_type=jnp.float32)
    acc = acc + jnp.dot(u_ref[...], wB_ref[...], preferred_element_type=jnp.float32)
    o_ref[...] = acc.astype(o_ref.dtype)


def fold_ssm_weights(A, B):
    """Fold (A, B) params into two matmul weights (wA, wB).

    wA: (state_order*state_dim, state_dim) with the residual x[:, -1, :]
        folded in as an identity block on the last state_dim rows.
    wB: (action_order*action_dim, state_dim).
    Pure function; under jit it is recomputed whenever A/B change.
    """
    state_order, state_dim, _ = A.shape
    action_order, action_dim, _ = B.shape
    wA = A.reshape(state_order * state_dim, state_dim)
    wB = B.reshape(action_order * action_dim, state_dim)
    eye = jnp.eye(state_dim, dtype=wA.dtype)
    wA = wA.at[(state_order - 1) * state_dim:].add(eye)
    return wA, wB


def _round_up(x, m):
    return ((x + m - 1) // m) * m


def _pick_tile_b(Bn, max_tile_b):
    """Batch tile: big enough to amortize per-step overhead, >=2 grid steps for
    medium/large batches so v7x can shard across its two TensorCores, and a
    multiple of 8 sublanes whenever it is smaller than the full batch."""
    if Bn > max_tile_b:
        return max_tile_b
    if Bn >= 1024:
        # Split into (at least) two tiles for megacore sharding on v7x.
        return min(max_tile_b, _round_up(pl.cdiv(Bn, 2), 8))
    return Bn  # block == full dim is always legal


def multi_linear_res_ssm1_forward(x, u, A, B, *, max_tile_b=8192,
                                  compute_dtype=jnp.bfloat16):
    """Pallas implementation of MultiLinearResSSM1.forward.

    x: (Bn, state_order, state_dim)
    u: (Bn, action_order, action_dim)
    A: (state_order, state_dim, state_dim)
    B: (action_order, action_dim, state_dim)
    returns: (Bn, state_dim) in x.dtype
    """
    Bn, state_order, state_dim = x.shape
    _, action_order, action_dim = u.shape
    Kx = state_order * state_dim
    Ku = action_order * action_dim
    out_dtype = x.dtype

    # Free metadata reshapes (contiguous) + cheap dtype cast — no concat.
    x_flat = x.reshape(Bn, Kx).astype(compute_dtype)
    u_flat = u.reshape(Bn, Ku).astype(compute_dtype)
    wA, wB = fold_ssm_weights(A, B)
    wA = wA.astype(compute_dtype)
    wB = wB.astype(compute_dtype)

    tile_b = _pick_tile_b(Bn, max_tile_b)
    grid = (pl.cdiv(Bn, tile_b),)

    act_bytes = jnp.dtype(compute_dtype).itemsize
    out_bytes = jnp.dtype(out_dtype).itemsize
    cost = pl.CostEstimate(
        flops=2 * Bn * (Kx + Ku) * state_dim,
        transcendentals=0,
        bytes_accessed=(Bn * (Kx + Ku) + (Kx + Ku) * state_dim) * act_bytes
                       + Bn * state_dim * out_bytes,
    )

    out = pl.pallas_call(
        _ssm_kernel,
        out_shape=jax.ShapeDtypeStruct((Bn, state_dim), out_dtype),
        grid=grid,
        in_specs=[
            # Activation streams tile over the batch axis (double-buffered).
            pl.BlockSpec((tile_b, Kx), lambda i: (i, 0)),
            pl.BlockSpec((tile_b, Ku), lambda i: (i, 0)),
            # Weights stay VMEM-resident across all grid steps.
            pl.BlockSpec((Kx, state_dim), lambda i: (0, 0)),
            pl.BlockSpec((Ku, state_dim), lambda i: (0, 0)),
        ],
        out_specs=pl.BlockSpec((tile_b, state_dim), lambda i: (i, 0)),
        compiler_params=pltpu.CompilerParams(
            dimension_semantics=("parallel",),
        ),
        cost_estimate=cost,
    )(x_flat, u_flat, wA, wB)
    return out


def _reference_forward(x, u, A, B):
    ar = jnp.sum(jnp.einsum('box,oxy->boy', x, A), axis=1)
    exo = jnp.sum(jnp.einsum('box,oxy->boy', u, B), axis=1)
    return ar + exo + x[:, -1, :]


if __name__ == "__main__":
    # Small shapes consistent with the module's forward signature.
    state_dim = 32
    action_dim = 8
    state_order = 4
    action_order = 3
    batch = 8

    key = jax.random.PRNGKey(0)
    kx, ku, kA, kB = jax.random.split(key, 4)

    x = jax.random.normal(kx, (batch, state_order, state_dim), dtype=jnp.float32)
    u = jax.random.normal(ku, (batch, action_order, action_dim), dtype=jnp.float32)
    # Deterministic synthetic parameters (module inits them to zeros; random
    # values make the check non-trivial).
    A = 0.1 * jax.random.normal(kA, (state_order, state_dim, state_dim), dtype=jnp.float32)
    Bm = 0.1 * jax.random.normal(kB, (action_order, action_dim, state_dim), dtype=jnp.float32)

    ref = _reference_forward(x, u, A, Bm)

    # f32 path: bit-tight check against the reference.
    out_f32 = multi_linear_res_ssm1_forward(x, u, A, Bm, compute_dtype=jnp.float32)
    out_f32 = jax.block_until_ready(out_f32)
    assert out_f32.shape == (batch, state_dim)
    assert jnp.allclose(out_f32, ref, atol=1e-5, rtol=1e-5), "f32 mismatch vs reference"

    # bf16 path (default, production config): loose tolerance from input rounding.
    out_bf16 = multi_linear_res_ssm1_forward(x, u, A, Bm)
    out_bf16 = jax.block_until_ready(out_bf16)
    assert out_bf16.shape == (batch, state_dim)
    assert jnp.allclose(out_bf16, ref, atol=7e-2, rtol=7e-2), "bf16 mismatch vs reference"

    print("KERNEL_OK")
</pallas_src>

<mosaic_0001>
module attributes {stable_mosaic.version = 11 : i64} {
  func.func @_ssm_kernel(%arg0: i32, %arg1: memref<8x128xf32, #tpu.memory_space<vmem>>, %arg2: memref<8x24xf32, #tpu.memory_space<vmem>>, %arg3: memref<128x32xf32, #tpu.memory_space<vmem>>, %arg4: memref<24x32xf32, #tpu.memory_space<vmem>>, %arg5: memref<8x32xf32, #tpu.memory_space<vmem>>) attributes {dimension_semantics = [#tpu.dimension_semantics<parallel>], iteration_bounds = array<i64: 1>, scalar_prefetch = 0 : i64, scratch_operands = 0 : i64, tpu.core_type = #tpu.core_type<tc>, window_params = [{transform_indices = @transform_0, window_bounds = array<i64: 8, 128>}, {transform_indices = @transform_1, window_bounds = array<i64: 8, 24>}, {pipeline_mode = #tpu.pipeline_mode<synchronous>, transform_indices = @transform_2, window_bounds = array<i64: 128, 32>}, {pipeline_mode = #tpu.pipeline_mode<synchronous>, transform_indices = @transform_3, window_bounds = array<i64: 24, 32>}, {transform_indices = @transform_4, window_bounds = array<i64: 8, 32>}]} {
    %c0 = arith.constant 0 : index
    %c0_0 = arith.constant 0 : index
    %0 = vector.load %arg1[%c0, %c0_0] : memref<8x128xf32, #tpu.memory_space<vmem>>, vector<8x128xf32>
    %c0_1 = arith.constant 0 : index
    %c0_2 = arith.constant 0 : index
    %1 = vector.load %arg3[%c0_1, %c0_2] : memref<128x32xf32, #tpu.memory_space<vmem>>, vector<128x32xf32>
    %cst = arith.constant dense<0.000000e+00> : vector<8x32xf32>
    %2 = tpu.matmul %0, %1, %cst {dimension_numbers = #tpu.dot_dimension_numbers<[1], [0], [0], [1], [0, 0, 1, 1], [], []>} : vector<8x128xf32>, vector<128x32xf32>, vector<8x32xf32> -> vector<8x32xf32>
    %c0_3 = arith.constant 0 : index
    %c0_4 = arith.constant 0 : index
    %3 = vector.load %arg2[%c0_3, %c0_4] : memref<8x24xf32, #tpu.memory_space<vmem>>, vector<8x24xf32>
    %c0_5 = arith.constant 0 : index
    %c0_6 = arith.constant 0 : index
    %4 = vector.load %arg4[%c0_5, %c0_6] : memref<24x32xf32, #tpu.memory_space<vmem>>, vector<24x32xf32>
    %cst_7 = arith.constant dense<0.000000e+00> : vector<8x32xf32>
    %5 = tpu.matmul %3, %4, %cst_7 {dimension_numbers = #tpu.dot_dimension_numbers<[1], [0], [0], [1], [0, 0, 1, 1], [], []>} : vector<8x24xf32>, vector<24x32xf32>, vector<8x32xf32> -> vector<8x32xf32>
    %6 = arith.addf %2, %5 : vector<8x32xf32>
    %c0_8 = arith.constant 0 : index
    %c0_9 = arith.constant 0 : index
    %7 = vector.load %arg5[%c0_8, %c0_9] : memref<8x32xf32, #tpu.memory_space<vmem>>, vector<8x32xf32>
    tpu.vector_store %arg5[%c0_8, %c0_9], %6 {strides = array<i32>} : memref<8x32xf32, #tpu.memory_space<vmem>>, vector<8x32xf32>,
    return
  }
  func.func @transform_0(%arg0: i32) -> (i32, i32) {
    %c0_i32 = arith.constant 0 : i32
    %c0_i32_0 = arith.constant 0 : i32
    return %arg0, %c0_i32 : i32, i32
  }
  func.func @transform_1(%arg0: i32) -> (i32, i32) {
    %c0_i32 = arith.constant 0 : i32
    %c0_i32_0 = arith.constant 0 : i32
    return %arg0, %c0_i32 : i32, i32
  }
  func.func @transform_2(%arg0: i32) -> (i32, i32) {
    %c0_i32 = arith.constant 0 : i32
    %c0_i32_0 = arith.constant 0 : i32
    %c0_i32_1 = arith.constant 0 : i32
    return %c0_i32, %c0_i32_0 : i32, i32
  }
  func.func @transform_3(%arg0: i32) -> (i32, i32) {
    %c0_i32 = arith.constant 0 : i32
    %c0_i32_0 = arith.constant 0 : i32
    %c0_i32_1 = arith.constant 0 : i32
    return %c0_i32, %c0_i32_0 : i32, i32
  }
  func.func @transform_4(%arg0: i32) -> (i32, i32) {
    %c0_i32 = arith.constant 0 : i32
    %c0_i32_0 = arith.constant 0 : i32
    return %arg0, %c0_i32 : i32, i32
  }
}

</mosaic_0001>

<llo_original>
// kernel: tpu_custom_call.1
$region0: #{tpu_custom_call.1}
  #allocation0 [shape = 'u32[]', space=smem, size = 0x4, offset = 0x4, fixed_abs, tag = 'smem constant byte address 0x4 - core index']
  #allocation1 [shape = 'u32[72,128]{1,0:T(1,128)}', space=vmem, size = 0x9000, scoped, tag = 'internal scratch']
  %s0 = inlined_call_operand.vmem [shape: f32[8,128], index: 0, kind: input, shape index: {}]
  %s1 = inlined_call_operand.vmem [shape: f32[8,24], index: 1, kind: input, shape index: {}]
  %s2 = inlined_call_operand.vmem [shape: f32[128,32], index: 2, kind: input, shape index: {}]
  %s3 = inlined_call_operand.vmem [shape: f32[24,32], index: 3, kind: input, shape index: {}]
  %s4 = inlined_call_operand.hbm [shape: f32[8,32], index: 4, kind: output, shape index: {}]
  %s5 = sld [smem:[#allocation0]]
  $region26: #{tpu_custom_call.1} parent=0
    _
  %s7 = ssub.s32 1, %s5
  %s8 = scalar_select 0, %s7, %s5
  $region1: #{tpu_custom_call.1} parent=0
    #allocation2 [shape = 'u8[4096]{0}', space=vmem, size = 0x1000, scoped, tag = 'output window, operand 0, single buffered']
    #allocation3 [shape = 's32[1]{0}', space=sflag, size = 0x4, scoped, tag = 'scoped memory for tpu_custom_call.1']
    %9 = vsyncpa [#allocation3], 0
    // Predicated region
    $region2: #{tpu_custom_call.1} parent=1 // pred_check
      _
    $region3: #{tpu_custom_call.1} parent=1 // pred_check_branch
      %11 = sbr.rel (0) target = $region5
    $region4: #{tpu_custom_call.1} parent=1 // pred_region
      _
    $region5: #{tpu_custom_call.1} parent=1 // pred_fallthru
      _
    // Predicated region
    $region6: #{tpu_custom_call.1} parent=1 // pred_check
      _
    $region7: #{tpu_custom_call.1} parent=1 // pred_check_branch
      %13 = sbr.rel (0) target = $region9
    $region8: #{tpu_custom_call.1} parent=1 // pred_region
      _
    $region9: #{tpu_custom_call.1} parent=1 // pred_fallthru
      _
    // Predicated region
    $region10: #{tpu_custom_call.1} parent=1 // pred_check
      _
    $region11: #{tpu_custom_call.1} parent=1 // pred_check_branch
      %15 = sbr.rel (0) target = $region13
    $region12: #{tpu_custom_call.1} parent=1 // pred_region
      _
    $region13: #{tpu_custom_call.1} parent=1 // pred_fallthru
      _
    // Predicated region
    $region14: #{tpu_custom_call.1} parent=1 // pred_check
      _
    $region15: #{tpu_custom_call.1} parent=1 // pred_check_branch
      %17 = sbr.rel (0) target = $region17
    $region16: #{tpu_custom_call.1} parent=1 // pred_region
      _
    $region17: #{tpu_custom_call.1} parent=1 // pred_fallthru
      _
    %v18 = vld [vmem:[%s0] sm:$0xff]
    %v19 = vld [vmem:[%s2] sm:$0xff]
    %v20 = vld [vmem:[%s2 + $0x8] sm:$0xff]
    %v21 = vld [vmem:[%s2 + $0x10] sm:$0xff]
    %v22 = vld [vmem:[%s2 + $0x18] sm:$0xff]
    %v23 = vld [vmem:[%s2 + $0x20] sm:$0xff]
    %v24 = vld [vmem:[%s2 + $0x28] sm:$0xff]
    %v25 = vld [vmem:[%s2 + $0x30] sm:$0xff]
    %v26 = vld [vmem:[%s2 + $0x38] sm:$0xff]
    %v27 = vld [vmem:[%s2 + $0x40] sm:$0xff]
    %v28 = vld [vmem:[%s2 + $0x48] sm:$0xff]
    %v29 = vld [vmem:[%s2 + $0x50] sm:$0xff]
    %v30 = vld [vmem:[%s2 + $0x58] sm:$0xff]
    %v31 = vld [vmem:[%s2 + $0x60] sm:$0xff]
    %v32 = vld [vmem:[%s2 + $0x68] sm:$0xff]
    %v33 = vld [vmem:[%s2 + $0x70] sm:$0xff]
    %v34 = vld [vmem:[%s2 + $0x78] sm:$0xff]
    %v35 = vld [vmem:[%s1] sm:$0xff]
    %v36 = vld [vmem:[%s3] sm:$0xff]
    %v37 = vld [vmem:[%s3 + $0x8] sm:$0xff]
    %v38 = vld [vmem:[%s3 + $0x10] sm:$0xff]
    %vm39 = vcmask 195584
    %v41 = vsel %vm39, %v35, 0
    %43 = vmatpush.msra.mxu0 0.0
    %44 = vmatpush.msra.mxu0 0.0
    %45 = vmatpush.msra.mxu0 0.0
    %46 = vmatpush.msra.mxu0 0.0
    %47 = vmatpush.msra.mxu0 0.0
    %48 = vmatpush.msra.mxu0 0.0
    %49 = vmatpush.msra.mxu0 0.0
    %50 = vmatpush.msra.mxu0 0.0
    %51 = vmatpush.msra.mxu0 0.0
    %52 = vmatpush.msra.mxu0 0.0
    %53 = vmatpush.msra.mxu0 0.0
    %54 = vmatpush.msra.mxu0 0.0
    %55 = vmatpush.msra.mxu0 0.0
    %56 = vmatpush.msra.mxu0 %v38
    %57 = vmatpush.msra.mxu0 %v37
    %58 = vmatpush.msra.mxu0 %v36
    %59 = vmatmul.f32.gmra.mxu0 %v41
    %v60 = vpop.f32.mrf.mxu0
    %v61 = vadd.f32 0.0, %v60
    %62 = vdwg.mxu0
    %63 = vmatpush.msra.mxu0 %v34
    %64 = vmatpush.msra.mxu0 %v33
    %65 = vmatpush.msra.mxu0 %v32
    %66 = vmatpush.msra.mxu0 %v31
    %67 = vmatpush.msra.mxu0 %v30
    %68 = vmatpush.msra.mxu0 %v29
    %69 = vmatpush.msra.mxu0 %v28
    %70 = vmatpush.msra.mxu0 %v27
    %71 = vmatpush.msra.mxu0 %v26
    %72 = vmatpush.msra.mxu0 %v25
    %73 = vmatpush.msra.mxu0 %v24
    %74 = vmatpush.msra.mxu0 %v23
    %75 = vmatpush.msra.mxu0 %v22
    %76 = vmatpush.msra.mxu0 %v21
    %77 = vmatpush.msra.mxu0 %v20
    %78 = vmatpush.msra.mxu0 %v19
    %79 = vmatmul.f32.gmra.mxu0 %v18
    %v80 = vpop.f32.mrf.mxu0
    %v81 = vadd.f32 %v61, %v80
    %82 = vdwg.mxu0
    %vm83 = vcmask 261120
    %84 = vst.msk [vmem:[#allocation2] sm:$0xff] %vm83, %v81
    // Predicated region
    $region18: #{tpu_custom_call.1} parent=1 // pred_check
      _
    $region19: #{tpu_custom_call.1} parent=1 // pred_check_branch
      %86 = sbr.rel (0) target = $region21
    $region20: #{tpu_custom_call.1} parent=1 // pred_region
      %88 = vsyncadd [#allocation3], 0
      %s90 = sshll.u32 [#allocation2], 4
      %s91 = int_to_ptr.vmem [resolvable:$true] %s90
      %s92 = sshll.u32 %s4, 4
      %s93 = int_to_ptr.hbm [resolvable:$true] %s92
      %95 = dma.vmem_to_hbm [thread:$0]  %s91, 128, %s93, [#allocation3]
    $region21: #{tpu_custom_call.1} parent=1 // pred_fallthru
      _
    // Predicated region
    $region22: #{tpu_custom_call.1} parent=1 // pred_check
      _
    $region23: #{tpu_custom_call.1} parent=1 // pred_check_branch
      %97 = sbr.rel (0) target = $region25
    $region24: #{tpu_custom_call.1} parent=1 // pred_region
      %99 = dma.done [#allocation3], 128
    $region25: #{tpu_custom_call.1} parent=1 // pred_fallthru
      _
    %100 = vsyncpa [#allocation3], 1

</llo_original>
